<compile_context>
chip_gen: v7x
topology: tpu7x:2x2x1
jax: 0.10.0
libtpu: 0.0.40
codegen_flags: <defaults>
</compile_context>

<pallas_src>
import math

import jax
import jax.numpy as jnp
from jax.experimental import pallas as pl
from jax.experimental.pallas import tpu as pltpu


def _round_up(x, m):
    return (x + m - 1) // m * m


# ----------------------------------------------------------------------------
# Kernels
# ----------------------------------------------------------------------------
def _diag_kernel(x_ref, d_ref, b_ref, o_ref):
    # x_ref: (TM, F), d_ref: (1, F) f32, b_ref: (1, F) f32, o_ref: (TM, F)
    # Pure VPU FMA in f32; cast only on the store.
    x = x_ref[...].astype(jnp.float32)
    o_ref[...] = (x * d_ref[...] + b_ref[...]).astype(o_ref.dtype)


def _dense_kernel(x_ref, w_ref, b_ref, o_ref):
    # x_ref: (TM, in_f), w_ref: (out_p, in_f), b_ref: (1, out_p) f32,
    # o_ref: (TM, out_p).  Contract on last dims (no in-kernel transpose),
    # accumulate in f32 on the MXU, f32 epilogue, cast on store.
    acc = jax.lax.dot_general(
        x_ref[...],
        w_ref[...],
        dimension_numbers=(((1,), (1,)), ((), ())),
        preferred_element_type=jnp.float32,
    )
    o_ref[...] = (acc + b_ref[...]).astype(o_ref.dtype)


# ----------------------------------------------------------------------------
# One-time parameter prep (per module / per sequence — NOT per timestep)
# ----------------------------------------------------------------------------
def prepare_filter_linear_params(
    weight, filter_mat, bias=None, *, compute_dtype=jnp.float32, lane=128
):
    """Hoists the constant 0/1 mask multiply and packs parameters.

    If (filter * W) is diagonal (GRU-D's identity filter), only the diagonal
    is kept and the forward becomes a VPU scale+bias.  Otherwise the masked
    weight is padded once on the out dim to a lane-dense multiple of 128 and
    (optionally) cast to `compute_dtype` (e.g. bf16) for the MXU.
    """
    out_f, in_f = weight.shape
    assert filter_mat.shape == (out_f, in_f)

    masked_w = filter_mat * weight  # loop-invariant hoist

    is_diag = False
    if out_f == in_f:
        eye = jnp.eye(out_f, dtype=filter_mat.dtype)
        is_diag = bool(jnp.all(filter_mat * (1.0 - eye) == 0.0))

    if is_diag:
        diag = jnp.diagonal(masked_w).reshape(1, out_f).astype(jnp.float32)
        b = jnp.zeros((1, out_f), jnp.float32)
        if bias is not None:
            b = b.at[0, :].set(bias.astype(jnp.float32))
        return dict(mode="diag", diag=diag, bias=b,
                    in_features=in_f, out_features=out_f)

    # General mask: pad only the out dim (lane-dense output stores); the in
    # dim is left unpadded so x needs no per-call feature-dim pad copy.
    out_p = _round_up(out_f, lane)
    w = jnp.zeros((out_p, in_f), compute_dtype)
    w = w.at[:out_f, :].set(masked_w.astype(compute_dtype))
    b = jnp.zeros((1, out_p), jnp.float32)
    if bias is not None:
        b = b.at[0, :out_f].set(bias.astype(jnp.float32))
    return dict(mode="dense", weight=w, bias=b, compute_dtype=compute_dtype,
                in_features=in_f, out_features=out_f)


# ----------------------------------------------------------------------------
# Forward wrapper
# ----------------------------------------------------------------------------
def _row_tile(rows, dtype, row_tile):
    # Sublane multiple depends on packing: 8 rows for 4-byte, 16 for 2-byte.
    sub = max(8, 32 // jnp.dtype(dtype).itemsize)
    tm = min(row_tile, _round_up(rows, sub))
    # Keep >= 2 grid steps when the row count allows, so the "parallel" row
    # axis can shard across v7x's two TensorCores.
    if rows >= 2 * sub and pl.cdiv(rows, tm) < 2:
        tm = _round_up(pl.cdiv(rows, 2), sub)
    return tm


def _pad_rows(x, rows_p):
    rows = x.shape[0]
    if rows_p == rows:
        return x
    return jnp.pad(x, ((0, rows_p - rows), (0, 0)))


def filter_linear(x, params, *, row_tile=512, trim=True):
    """y = x @ (filter * W).T + b  using the prepared parameters.

    `x` may be (B, in_features) for one timestep or (T*B, in_features) for a
    whole fused sequence: rows are tiled over the grid while the (tiny)
    parameters stay VMEM-resident.  With `trim=False` the lane/row-padded
    output buffer is returned (slice once at the end of a sequence instead of
    per call).
    """
    rows, in_f = x.shape
    assert in_f == params["in_features"]
    out_f = params["out_features"]
    out_dtype = x.dtype

    if params["mode"] == "diag":
        tm = _row_tile(rows, x.dtype, row_tile)
        rows_p = _round_up(rows, tm)
        x_p = _pad_rows(x, rows_p)
        y = pl.pallas_call(
            _diag_kernel,
            out_shape=jax.ShapeDtypeStruct((rows_p, out_f), out_dtype),
            grid=(rows_p // tm,),
            in_specs=[
                pl.BlockSpec((tm, in_f), lambda i: (i, 0)),   # row tile of x
                pl.BlockSpec((1, in_f), lambda i: (0, 0)),    # diag: resident
                pl.BlockSpec((1, out_f), lambda i: (0, 0)),   # bias: resident
            ],
            out_specs=pl.BlockSpec((tm, out_f), lambda i: (i, 0)),
            compiler_params=pltpu.CompilerParams(
                dimension_semantics=("parallel",),
            ),
        )(x_p, params["diag"], params["bias"])
        if trim and rows_p != rows:
            y = y[:rows]
        return y

    # Dense (general 0/1 mask) path.
    w = params["weight"]
    cdt = params["compute_dtype"]
    out_p = w.shape[0]
    tm = _row_tile(rows, cdt, row_tile)
    rows_p = _round_up(rows, tm)
    x_p = _pad_rows(x.astype(cdt), rows_p)

    y = pl.pallas_call(
        _dense_kernel,
        out_shape=jax.ShapeDtypeStruct((rows_p, out_p), out_dtype),
        grid=(rows_p // tm,),
        in_specs=[
            pl.BlockSpec((tm, in_f), lambda i: (i, 0)),     # row tile of x
            pl.BlockSpec((out_p, in_f), lambda i: (0, 0)),  # masked W: resident
            pl.BlockSpec((1, out_p), lambda i: (0, 0)),     # bias: resident
        ],
        out_specs=pl.BlockSpec((tm, out_p), lambda i: (i, 0)),
        compiler_params=pltpu.CompilerParams(
            dimension_semantics=("parallel",),
        ),
    )(x_p, w, params["bias"])
    if trim:
        y = y[:rows, :out_f]
    return y


# ----------------------------------------------------------------------------
# Demo / correctness check
# ----------------------------------------------------------------------------
if __name__ == "__main__":
    batch, feats = 8, 32
    key = jax.random.PRNGKey(0)
    kx, kw, kb, km, ks = jax.random.split(key, 5)

    # reset_parameters(): uniform(-stdv, stdv), stdv = 1/sqrt(in_features)
    stdv = 1.0 / math.sqrt(feats)
    weight = jax.random.uniform(kw, (feats, feats), jnp.float32, -stdv, stdv)
    bias = jax.random.uniform(kb, (feats,), jnp.float32, -stdv, stdv)

    # ---- GRU-D case: identity filter -> diagonal fast path (no MXU) ----
    filt_eye = jnp.eye(feats, dtype=jnp.float32)
    p_eye = prepare_filter_linear_params(weight, filt_eye, bias)
    assert p_eye["mode"] == "diag"

    x = jax.random.normal(kx, (batch, feats), jnp.float32)
    y = jax.block_until_ready(filter_linear(x, p_eye))
    y_ref = x @ (filt_eye * weight).T + bias
    assert jnp.allclose(y, y_ref, atol=1e-5, rtol=1e-5), "diag single-step mismatch"

    T = 32
    x_seq = jax.random.normal(ks, (T * batch, feats), jnp.float32)
    y_seq = jax.block_until_ready(filter_linear(x_seq, p_eye))
    y_seq_ref = x_seq @ (filt_eye * weight).T + bias
    assert jnp.allclose(y_seq, y_seq_ref, atol=1e-5, rtol=1e-5), "diag fused mismatch"

    # ---- General 0/1 mask -> dense masked-matmul path (f32) ----
    filt_rand = (jax.random.uniform(km, (feats, feats)) < 0.5).astype(jnp.float32)
    p_dense = prepare_filter_linear_params(weight, filt_rand, bias)
    assert p_dense["mode"] == "dense"
    y_d = jax.block_until_ready(filter_linear(x_seq, p_dense))
    y_d_ref = x_seq @ (filt_rand * weight).T + bias
    assert jnp.allclose(y_d, y_d_ref, atol=1e-5, rtol=1e-5), "dense f32 mismatch"

    # ---- Dense path with bf16 weights/activations, f32 accumulate ----
    p_bf16 = prepare_filter_linear_params(
        weight, filt_rand, bias, compute_dtype=jnp.bfloat16
    )
    y_b = jax.block_until_ready(filter_linear(x_seq, p_bf16))
    assert jnp.allclose(y_b, y_d_ref, atol=5e-2, rtol=5e-2), "dense bf16 mismatch"

    print("KERNEL_OK")
</pallas_src>

<mosaic_0001>
module attributes {stable_mosaic.version = 11 : i64} {
  func.func @_diag_kernel(%arg0: i32, %arg1: memref<8x32xf32, #tpu.memory_space<vmem>>, %arg2: memref<1x32xf32, #tpu.memory_space<vmem>>, %arg3: memref<1x32xf32, #tpu.memory_space<vmem>>, %arg4: memref<8x32xf32, #tpu.memory_space<vmem>>) attributes {dimension_semantics = [#tpu.dimension_semantics<parallel>], iteration_bounds = array<i64: 1>, scalar_prefetch = 0 : i64, scratch_operands = 0 : i64, tpu.core_type = #tpu.core_type<tc>, window_params = [{transform_indices = @transform_0, window_bounds = array<i64: 8, 32>}, {pipeline_mode = #tpu.pipeline_mode<synchronous>, transform_indices = @transform_1, window_bounds = array<i64: 1, 32>}, {pipeline_mode = #tpu.pipeline_mode<synchronous>, transform_indices = @transform_2, window_bounds = array<i64: 1, 32>}, {transform_indices = @transform_3, window_bounds = array<i64: 8, 32>}]} {
    %c0 = arith.constant 0 : index
    %c0_0 = arith.constant 0 : index
    %0 = vector.load %arg1[%c0, %c0_0] : memref<8x32xf32, #tpu.memory_space<vmem>>, vector<8x32xf32>
    %c0_1 = arith.constant 0 : index
    %c0_2 = arith.constant 0 : index
    %1 = vector.load %arg2[%c0_1, %c0_2] : memref<1x32xf32, #tpu.memory_space<vmem>>, vector<1x32xf32>
    %2 = vector.broadcast %1 : vector<1x32xf32> to vector<8x32xf32>
    %3 = arith.mulf %0, %2 : vector<8x32xf32>
    %c0_3 = arith.constant 0 : index
    %c0_4 = arith.constant 0 : index
    %4 = vector.load %arg3[%c0_3, %c0_4] : memref<1x32xf32, #tpu.memory_space<vmem>>, vector<1x32xf32>
    %5 = vector.broadcast %4 : vector<1x32xf32> to vector<8x32xf32>
    %6 = arith.addf %3, %5 : vector<8x32xf32>
    %c0_5 = arith.constant 0 : index
    %c0_6 = arith.constant 0 : index
    %7 = vector.load %arg4[%c0_5, %c0_6] : memref<8x32xf32, #tpu.memory_space<vmem>>, vector<8x32xf32>
    tpu.vector_store %arg4[%c0_5, %c0_6], %6 {strides = array<i32>} : memref<8x32xf32, #tpu.memory_space<vmem>>, vector<8x32xf32>,
    return
  }
  func.func @transform_0(%arg0: i32) -> (i32, i32) {
    %c0_i32 = arith.constant 0 : i32
    %c0_i32_0 = arith.constant 0 : i32
    return %arg0, %c0_i32 : i32, i32
  }
  func.func @transform_1(%arg0: i32) -> (i32, i32) {
    %c0_i32 = arith.constant 0 : i32
    %c0_i32_0 = arith.constant 0 : i32
    %c0_i32_1 = arith.constant 0 : i32
    return %c0_i32, %c0_i32_0 : i32, i32
  }
  func.func @transform_2(%arg0: i32) -> (i32, i32) {
    %c0_i32 = arith.constant 0 : i32
    %c0_i32_0 = arith.constant 0 : i32
    %c0_i32_1 = arith.constant 0 : i32
    return %c0_i32, %c0_i32_0 : i32, i32
  }
  func.func @transform_3(%arg0: i32) -> (i32, i32) {
    %c0_i32 = arith.constant 0 : i32
    %c0_i32_0 = arith.constant 0 : i32
    return %arg0, %c0_i32 : i32, i32
  }
}

</mosaic_0001>

<llo_original>
// kernel: tpu_custom_call.1
$region0: #{tpu_custom_call.1}
  #allocation0 [shape = 'u32[]', space=smem, size = 0x4, offset = 0x4, fixed_abs, tag = 'smem constant byte address 0x4 - core index']
  #allocation1 [shape = 'u32[144,128]{1,0:T(1,128)}', space=vmem, size = 0x12000, scoped, tag = 'internal scratch']
  %s0 = inlined_call_operand.hbm [shape: f32[8,32], index: 0, kind: input, shape index: {}]
  %s1 = inlined_call_operand.vmem [shape: f32[1,32], index: 1, kind: input, shape index: {}]
  %s2 = inlined_call_operand.vmem [shape: f32[1,32], index: 2, kind: input, shape index: {}]
  %s3 = inlined_call_operand.hbm [shape: f32[8,32], index: 3, kind: output, shape index: {}]
  %s4 = sld [smem:[#allocation0]]
  $region26: #{tpu_custom_call.1} parent=0
    _
  %s6 = ssub.s32 1, %s4
  %s7 = scalar_select 0, %s6, %s4
  $region1: #{tpu_custom_call.1} parent=0
    #allocation2 [shape = 'u8[4096]{0}', space=vmem, size = 0x1000, scoped, tag = 'input window, operand 0, single buffered']
    #allocation3 [shape = 's32[1]{0}', space=sflag, size = 0x4, scoped, tag = 'scoped memory for tpu_custom_call.1']
    #allocation4 [shape = 's32[1]{0}', space=sflag, size = 0x4, scoped, tag = 'scoped memory for tpu_custom_call.1']
    #allocation5 [shape = 'u8[4096]{0}', space=vmem, size = 0x1000, scoped, tag = 'output window, operand 0, single buffered']
    %8 = vsyncpa [#allocation3], 0
    %9 = vsyncpa [#allocation4], 0
    // Predicated region
    $region2: #{tpu_custom_call.1} parent=1 // pred_check
      _
    $region3: #{tpu_custom_call.1} parent=1 // pred_check_branch
      %11 = sbr.rel (0) target = $region5
    $region4: #{tpu_custom_call.1} parent=1 // pred_region
      %s13 = ssub.s32 128, 128
      %14 = vsyncadd [#allocation3], %s13
      %s16 = sshll.u32 [#allocation2], 4
      %s17 = int_to_ptr.vmem [resolvable:$true] %s16
      %19 = dma.hbm_to_vmem [thread:$0]  %s0, 128, %s17, [#allocation3]
    $region5: #{tpu_custom_call.1} parent=1 // pred_fallthru
      _
    // Predicated region
    $region6: #{tpu_custom_call.1} parent=1 // pred_check
      _
    $region7: #{tpu_custom_call.1} parent=1 // pred_check_branch
      %21 = sbr.rel (0) target = $region9
    $region8: #{tpu_custom_call.1} parent=1 // pred_region
      _
    $region9: #{tpu_custom_call.1} parent=1 // pred_fallthru
      _
    // Predicated region
    $region10: #{tpu_custom_call.1} parent=1 // pred_check
      _
    $region11: #{tpu_custom_call.1} parent=1 // pred_check_branch
      %23 = sbr.rel (0) target = $region13
    $region12: #{tpu_custom_call.1} parent=1 // pred_region
      _
    $region13: #{tpu_custom_call.1} parent=1 // pred_fallthru
      _
    // Predicated region
    $region14: #{tpu_custom_call.1} parent=1 // pred_check
      _
    $region15: #{tpu_custom_call.1} parent=1 // pred_check_branch
      %25 = sbr.rel (0) target = $region17
    $region16: #{tpu_custom_call.1} parent=1 // pred_region
      %26 = dma.done [#allocation3], 128
    $region17: #{tpu_custom_call.1} parent=1 // pred_fallthru
      _
    %v27 = vld [vmem:[#allocation2] sm:$0xff]
    %v28 = vld [vmem:[%s1] sm:$0x1]
    %v30 = vlaneseq
    %v31 = vshrl.u32 %v30, 7
    %v32 = vsub.s32 0, %v31
    %v33 = vrot.slane %v28, %v32
    %v35 = vmul.f32 %v27, %v33
    %v36 = vld [vmem:[%s2] sm:$0x1]
    %v38 = vlaneseq
    %v39 = vshrl.u32 %v38, 7
    %v40 = vsub.s32 0, %v39
    %v41 = vrot.slane %v36, %v40
    %v43 = vadd.f32 %v35, %v41
    %vm44 = vcmask 261120
    %45 = vst.msk [vmem:[#allocation5] sm:$0xff] %vm44, %v43
    // Predicated region
    $region18: #{tpu_custom_call.1} parent=1 // pred_check
      _
    $region19: #{tpu_custom_call.1} parent=1 // pred_check_branch
      %47 = sbr.rel (0) target = $region21
    $region20: #{tpu_custom_call.1} parent=1 // pred_region
      %s49 = ssub.s32 128, 128
      %50 = vsyncadd [#allocation4], %s49
      %s52 = sshll.u32 [#allocation5], 4
      %s53 = int_to_ptr.vmem [resolvable:$true] %s52
      %55 = dma.vmem_to_hbm [thread:$0]  %s53, 128, %s3, [#allocation4]
    $region21: #{tpu_custom_call.1} parent=1 // pred_fallthru
      _
    // Predicated region
    $region22: #{tpu_custom_call.1} parent=1 // pred_check
      _
    $region23: #{tpu_custom_call.1} parent=1 // pred_check_branch
      %57 = sbr.rel (0) target = $region25
    $region24: #{tpu_custom_call.1} parent=1 // pred_region
      %58 = dma.done [#allocation4], 128
    $region25: #{tpu_custom_call.1} parent=1 // pred_fallthru
      _
    %59 = vsyncpa [#allocation3], 1
    %60 = vsyncpa [#allocation4], 1

</llo_original>
